<compile_context>
chip_gen: v7x
topology: tpu7x:2x2x1
jax: 0.10.0
libtpu: 0.0.40
codegen_flags: <defaults>
</compile_context>

<pallas_src>
import jax
import jax.numpy as jnp
from jax.experimental import pallas as pl
from jax.experimental.pallas import tpu as pltpu

N_IN = 5
N_HID = 10
LANES = 128
SUBLANES = 8
ROWS_PER_CHUNK = 64      # in-kernel row chunk: ~24-48 live vregs, no spills
MIN_SPLIT_ROWS = 512     # only force >=4 grid blocks if each still has >=512 rows

# Offsets inside the packed params vector: [W1 (5*10) | b1 (10) | W2 (10) | b2 (1)]
# NOTE: W1 is stored (in_features, out_features).  PyTorch nn.Linear.weight is
# (out, in) and must be transposed before packing.
_W1_OFF = 0
_B1_OFF = N_IN * N_HID          # 50
_W2_OFF = _B1_OFF + N_HID       # 60
_B2_OFF = _W2_OFF + N_HID       # 70
_N_PARAMS = _B2_OFF + 1         # 71


def _cdiv(a, b):
    return -(-a // b)


def _round_up(a, m):
    return _cdiv(a, m) * m


def mlp_kernel(params_ref, x_ref, o_ref):
    """params_ref: (71,) f32 in SMEM (resident across the whole grid).
       x_ref:      (N_IN, TR, 128) block -- batch dense over sublanes x lanes.
       o_ref:      (TR, 128) f32 block."""
    tr = o_ref.shape[0]

    def compute_rows(r0, rows):
        # out = sum_j relu(sum_k x_k*W1[k,j] + b1[j]) * W2[j] + b2   (all VPU).
        acc = None
        for j in range(N_HID):
            h = None
            for k in range(N_IN):
                # Re-read x planes per hidden unit: keeps live vregs low
                # (one x chunk + h + acc) instead of 5 hoisted planes.
                xk = x_ref[k, pl.ds(r0, rows), :].astype(jnp.float32)
                term = xk * params_ref[_W1_OFF + k * N_HID + j]
                h = term if h is None else h + term        # -> FMA where HW has it
            h = jnp.maximum(h + params_ref[_B1_OFF + j], 0.0)
            term = h * params_ref[_W2_OFF + j]
            acc = term if acc is None else acc + term
        o_ref[pl.ds(r0, rows), :] = (acc + params_ref[_B2_OFF]).astype(o_ref.dtype)

    if tr <= ROWS_PER_CHUNK:
        compute_rows(0, tr)
    else:
        n_full = tr // ROWS_PER_CHUNK
        rem = tr - n_full * ROWS_PER_CHUNK

        @pl.loop(0, n_full)
        def _(c):
            r0 = pl.multiple_of(c * ROWS_PER_CHUNK, ROWS_PER_CHUNK)
            compute_rows(r0, ROWS_PER_CHUNK)

        if rem > 0:  # static tail; rem is a multiple of 8 by construction
            compute_rows(n_full * ROWS_PER_CHUNK, rem)


def mlp_forward(x, w1, b1, w2, b2, *, block_rows=1024, feature_major=False,
                x_hbm_dtype=jnp.float32):
    """Same semantics as the PyTorch MLP: out = relu(x @ w1 + b1) @ w2 + b2.

    x: (B, 5) f32 by default, or (5, B) if feature_major=True (skips the
       wrapper-side transpose entirely -- preferred upstream layout).
    w1: (5, 10) [= torch weight transposed], b1: (10,), w2: (10, 1), b2: (1,).
    Returns (B, 1) f32.  x_hbm_dtype=jnp.bfloat16 halves input HBM traffic
    (v5e lever); compute stays f32 so agreement is only ~1e-2 level then.
    """
    if feature_major:
        n_in, B = x.shape
    else:
        B, n_in = x.shape
    assert n_in == N_IN

    # Batch viewed as an (R, 128) slab -> dense over (sublanes, lanes).
    R = _cdiv(B, LANES)
    R8 = _round_up(R, SUBLANES)

    # Tile rows per grid step: big tiles amortize the ~0.35us/step pipeline
    # overhead; for very large batches cap the tile so there are >=4 blocks
    # (v7x dual-TensorCore + pipeline depth) without dropping below 512 rows.
    tr = min(block_rows, R8)
    if R8 >= 4 * MIN_SPLIT_ROWS:
        tr = min(tr, _round_up(_cdiv(R8, 4), SUBLANES))
    tr = max(SUBLANES, _round_up(tr, SUBLANES))
    num_blocks = _cdiv(R8, tr)
    R_pad = num_blocks * tr
    B_pad = R_pad * LANES

    x = x.astype(x_hbm_dtype)
    if feature_major:
        # Already feature-major: padding only, no transpose.
        x_slab = jnp.pad(x, ((0, 0), (0, B_pad - B))).reshape(N_IN, R_pad, LANES)
    else:
        # Layout plumbing (pad + transpose).  allow_input_fusion below lets XLA
        # fuse this into the kernel's input DMA when it can; pass
        # feature_major=True upstream to avoid it entirely.
        x_slab = jnp.pad(x, ((0, B_pad - B), (0, 0))).T.reshape(N_IN, R_pad, LANES)

    # Whole net packed into one flat SMEM operand (no per-step weight DMAs).
    params = jnp.concatenate([
        w1.reshape(-1), b1.reshape(-1), w2.reshape(-1), b2.reshape(-1)
    ]).astype(jnp.float32)
    assert params.shape[0] == _N_PARAMS

    out_2d = pl.pallas_call(
        mlp_kernel,
        out_shape=jax.ShapeDtypeStruct((R_pad, LANES), jnp.float32),
        grid=(num_blocks,),
        in_specs=[
            pl.BlockSpec(memory_space=pltpu.MemorySpace.SMEM),        # params
            pl.BlockSpec((N_IN, tr, LANES), lambda i: (0, i, 0)),     # x tile
        ],
        out_specs=pl.BlockSpec((tr, LANES), lambda i: (i, 0)),
        compiler_params=pltpu.CompilerParams(
            dimension_semantics=("parallel",),
            allow_input_fusion=[False, True],
        ),
    )(params, x_slab)

    return out_2d.reshape(B_pad)[:B].reshape(B, 1)


def init_params(key):
    """Deterministic init mimicking nn.Linear default (uniform +-1/sqrt(fan_in)).
    Stored transposed relative to PyTorch: (in_features, out_features)."""
    k1, k2, k3, k4 = jax.random.split(key, 4)
    bound1 = 1.0 / jnp.sqrt(5.0)
    bound2 = 1.0 / jnp.sqrt(10.0)
    w1 = jax.random.uniform(k1, (5, 10), jnp.float32, -bound1, bound1)
    b1 = jax.random.uniform(k2, (10,), jnp.float32, -bound1, bound1)
    w2 = jax.random.uniform(k3, (10, 1), jnp.float32, -bound2, bound2)
    b2 = jax.random.uniform(k4, (1,), jnp.float32, -bound2, bound2)
    return w1, b1, w2, b2


def _ref(x, w1, b1, w2, b2):
    return jnp.maximum(x @ w1 + b1, 0.0) @ w2 + b2


if __name__ == "__main__":
    key = jax.random.PRNGKey(0)
    k_x1, k_x2, k_x3, k_p = jax.random.split(key, 4)
    w1, b1, w2, b2 = init_params(k_p)

    fwd = jax.jit(mlp_forward,
                  static_argnames=("block_rows", "feature_major", "x_hbm_dtype"))

    def check(out, ref, atol=1e-5, rtol=1e-5):
        assert out.shape == ref.shape, (out.shape, ref.shape)
        err = float(jnp.max(jnp.abs(out - ref)))
        assert jnp.allclose(out, ref, atol=atol, rtol=rtol), err

    # 1) Tiny batch: single grid step, one padded (8, 128) tile.
    x1 = jax.random.normal(k_x1, (8, 5), jnp.float32)
    r1 = _ref(x1, w1, b1, w2, b2)
    check(jax.block_until_ready(fwd(x1, w1, b1, w2, b2)), r1)

    # 2) Non-aligned batch with a tiny block size -> multi-step grid + padding.
    x2 = jax.random.normal(k_x2, (2000, 5), jnp.float32)
    r2 = _ref(x2, w1, b1, w2, b2)
    check(jax.block_until_ready(fwd(x2, w1, b1, w2, b2, block_rows=8)), r2)

    # 3) Default (large-tile) config: exercises the in-kernel 64-row chunk
    #    loop plus its static tail (TR=96 -> one 64-row chunk + 32-row tail).
    x3 = jax.random.normal(k_x3, (12000, 5), jnp.float32)
    r3 = _ref(x3, w1, b1, w2, b2)
    check(jax.block_until_ready(fwd(x3, w1, b1, w2, b2)), r3)

    # 4) Feature-major (5, B) input: no wrapper-side transpose at all.
    check(jax.block_until_ready(
        fwd(jnp.asarray(x2.T), w1, b1, w2, b2, feature_major=True)), r2)

    # 5) Optional bf16 HBM feed (v5e bandwidth lever); compute stays f32, so
    #    only ~1e-2-level agreement with the f32 reference is expected.
    check(jax.block_until_ready(
        fwd(x2, w1, b1, w2, b2, x_hbm_dtype=jnp.bfloat16)), r2,
        atol=1e-1, rtol=1e-1)

    print("KERNEL_OK")
</pallas_src>

<mosaic_0001>
module attributes {stable_mosaic.version = 11 : i64} {
  func.func @mlp_kernel(%arg0: i32, %arg1: memref<71xf32, #tpu.memory_space<smem>>, %arg2: memref<5x8x128xf32, #tpu.memory_space<vmem>>, %arg3: memref<8x128xf32, #tpu.memory_space<vmem>>) attributes {dimension_semantics = [#tpu.dimension_semantics<parallel>], iteration_bounds = array<i64: 1>, scalar_prefetch = 0 : i64, scratch_operands = 0 : i64, tpu.core_type = #tpu.core_type<tc>, window_params = [{transform_indices = @transform_0, window_bounds = array<i64: 71>}, {transform_indices = @transform_1, window_bounds = array<i64: 5, 8, 128>}, {transform_indices = @transform_2, window_bounds = array<i64: 8, 128>}]} {
    %c0 = arith.constant 0 : index
    %c0_0 = arith.constant 0 : index
    %c0_1 = arith.constant 0 : index
    %0 = vector.load %arg2[%c0, %c0_0, %c0_1] : memref<5x8x128xf32, #tpu.memory_space<vmem>>, vector<1x8x128xf32>
    %1 = vector.shape_cast %0 : vector<1x8x128xf32> to vector<8x128xf32>
    %c0_2 = arith.constant 0 : index
    %2 = memref.load %arg1[%c0_2] : memref<71xf32, #tpu.memory_space<smem>>
    %3 = vector.broadcast %2 : f32 to vector<8x128xf32>
    %4 = arith.mulf %1, %3 : vector<8x128xf32>
    %c1 = arith.constant 1 : index
    %c0_3 = arith.constant 0 : index
    %c0_4 = arith.constant 0 : index
    %5 = vector.load %arg2[%c1, %c0_3, %c0_4] : memref<5x8x128xf32, #tpu.memory_space<vmem>>, vector<1x8x128xf32>
    %6 = vector.shape_cast %5 : vector<1x8x128xf32> to vector<8x128xf32>
    %c10 = arith.constant 10 : index
    %7 = memref.load %arg1[%c10] : memref<71xf32, #tpu.memory_space<smem>>
    %8 = vector.broadcast %7 : f32 to vector<8x128xf32>
    %9 = arith.mulf %6, %8 : vector<8x128xf32>
    %10 = arith.addf %4, %9 : vector<8x128xf32>
    %c2 = arith.constant 2 : index
    %c0_5 = arith.constant 0 : index
    %c0_6 = arith.constant 0 : index
    %11 = vector.load %arg2[%c2, %c0_5, %c0_6] : memref<5x8x128xf32, #tpu.memory_space<vmem>>, vector<1x8x128xf32>
    %12 = vector.shape_cast %11 : vector<1x8x128xf32> to vector<8x128xf32>
    %c20 = arith.constant 20 : index
    %13 = memref.load %arg1[%c20] : memref<71xf32, #tpu.memory_space<smem>>
    %14 = vector.broadcast %13 : f32 to vector<8x128xf32>
    %15 = arith.mulf %12, %14 : vector<8x128xf32>
    %16 = arith.addf %10, %15 : vector<8x128xf32>
    %c3 = arith.constant 3 : index
    %c0_7 = arith.constant 0 : index
    %c0_8 = arith.constant 0 : index
    %17 = vector.load %arg2[%c3, %c0_7, %c0_8] : memref<5x8x128xf32, #tpu.memory_space<vmem>>, vector<1x8x128xf32>
    %18 = vector.shape_cast %17 : vector<1x8x128xf32> to vector<8x128xf32>
    %c30 = arith.constant 30 : index
    %19 = memref.load %arg1[%c30] : memref<71xf32, #tpu.memory_space<smem>>
    %20 = vector.broadcast %19 : f32 to vector<8x128xf32>
    %21 = arith.mulf %18, %20 : vector<8x128xf32>
    %22 = arith.addf %16, %21 : vector<8x128xf32>
    %c4 = arith.constant 4 : index
    %c0_9 = arith.constant 0 : index
    %c0_10 = arith.constant 0 : index
    %23 = vector.load %arg2[%c4, %c0_9, %c0_10] : memref<5x8x128xf32, #tpu.memory_space<vmem>>, vector<1x8x128xf32>
    %24 = vector.shape_cast %23 : vector<1x8x128xf32> to vector<8x128xf32>
    %c40 = arith.constant 40 : index
    %25 = memref.load %arg1[%c40] : memref<71xf32, #tpu.memory_space<smem>>
    %26 = vector.broadcast %25 : f32 to vector<8x128xf32>
    %27 = arith.mulf %24, %26 : vector<8x128xf32>
    %28 = arith.addf %22, %27 : vector<8x128xf32>
    %c50 = arith.constant 50 : index
    %29 = memref.load %arg1[%c50] : memref<71xf32, #tpu.memory_space<smem>>
    %30 = vector.broadcast %29 : f32 to vector<8x128xf32>
    %31 = arith.addf %28, %30 : vector<8x128xf32>
    %cst = arith.constant 0.000000e+00 : f32
    %32 = vector.broadcast %cst : f32 to vector<8x128xf32>
    %33 = arith.maximumf %31, %32 : vector<8x128xf32>
    %c60 = arith.constant 60 : index
    %34 = memref.load %arg1[%c60] : memref<71xf32, #tpu.memory_space<smem>>
    %35 = vector.broadcast %34 : f32 to vector<8x128xf32>
    %36 = arith.mulf %33, %35 : vector<8x128xf32>
    %c0_11 = arith.constant 0 : index
    %c0_12 = arith.constant 0 : index
    %c0_13 = arith.constant 0 : index
    %37 = vector.load %arg2[%c0_11, %c0_12, %c0_13] : memref<5x8x128xf32, #tpu.memory_space<vmem>>, vector<1x8x128xf32>
    %38 = vector.shape_cast %37 : vector<1x8x128xf32> to vector<8x128xf32>
    %c1_14 = arith.constant 1 : index
    %39 = memref.load %arg1[%c1_14] : memref<71xf32, #tpu.memory_space<smem>>
    %40 = vector.broadcast %39 : f32 to vector<8x128xf32>
    %41 = arith.mulf %38, %40 : vector<8x128xf32>
    %c1_15 = arith.constant 1 : index
    %c0_16 = arith.constant 0 : index
    %c0_17 = arith.constant 0 : index
    %42 = vector.load %arg2[%c1_15, %c0_16, %c0_17] : memref<5x8x128xf32, #tpu.memory_space<vmem>>, vector<1x8x128xf32>
    %43 = vector.shape_cast %42 : vector<1x8x128xf32> to vector<8x128xf32>
    %c11 = arith.constant 11 : index
    %44 = memref.load %arg1[%c11] : memref<71xf32, #tpu.memory_space<smem>>
    %45 = vector.broadcast %44 : f32 to vector<8x128xf32>
    %46 = arith.mulf %43, %45 : vector<8x128xf32>
    %47 = arith.addf %41, %46 : vector<8x128xf32>
    %c2_18 = arith.constant 2 : index
    %c0_19 = arith.constant 0 : index
    %c0_20 = arith.constant 0 : index
    %48 = vector.load %arg2[%c2_18, %c0_19, %c0_20] : memref<5x8x128xf32, #tpu.memory_space<vmem>>, vector<1x8x128xf32>
    %49 = vector.shape_cast %48 : vector<1x8x128xf32> to vector<8x128xf32>
    %c21 = arith.constant 21 : index
    %50 = memref.load %arg1[%c21] : memref<71xf32, #tpu.memory_space<smem>>
    %51 = vector.broadcast %50 : f32 to vector<8x128xf32>
    %52 = arith.mulf %49, %51 : vector<8x128xf32>
    %53 = arith.addf %47, %52 : vector<8x128xf32>
    %c3_21 = arith.constant 3 : index
    %c0_22 = arith.constant 0 : index
    %c0_23 = arith.constant 0 : index
    %54 = vector.load %arg2[%c3_21, %c0_22, %c0_23] : memref<5x8x128xf32, #tpu.memory_space<vmem>>, vector<1x8x128xf32>
    %55 = vector.shape_cast %54 : vector<1x8x128xf32> to vector<8x128xf32>
    %c31 = arith.constant 31 : index
    %56 = memref.load %arg1[%c31] : memref<71xf32, #tpu.memory_space<smem>>
    %57 = vector.broadcast %56 : f32 to vector<8x128xf32>
    %58 = arith.mulf %55, %57 : vector<8x128xf32>
    %59 = arith.addf %53, %58 : vector<8x128xf32>
    %c4_24 = arith.constant 4 : index
    %c0_25 = arith.constant 0 : index
    %c0_26 = arith.constant 0 : index
    %60 = vector.load %arg2[%c4_24, %c0_25, %c0_26] : memref<5x8x128xf32, #tpu.memory_space<vmem>>, vector<1x8x128xf32>
    %61 = vector.shape_cast %60 : vector<1x8x128xf32> to vector<8x128xf32>
    %c41 = arith.constant 41 : index
    %62 = memref.load %arg1[%c41] : memref<71xf32, #tpu.memory_space<smem>>
    %63 = vector.broadcast %62 : f32 to vector<8x128xf32>
    %64 = arith.mulf %61, %63 : vector<8x128xf32>
    %65 = arith.addf %59, %64 : vector<8x128xf32>
    %c51 = arith.constant 51 : index
    %66 = memref.load %arg1[%c51] : memref<71xf32, #tpu.memory_space<smem>>
    %67 = vector.broadcast %66 : f32 to vector<8x128xf32>
    %68 = arith.addf %65, %67 : vector<8x128xf32>
    %cst_27 = arith.constant 0.000000e+00 : f32
    %69 = vector.broadcast %cst_27 : f32 to vector<8x128xf32>
    %70 = arith.maximumf %68, %69 : vector<8x128xf32>
    %c61 = arith.constant 61 : index
    %71 = memref.load %arg1[%c61] : memref<71xf32, #tpu.memory_space<smem>>
    %72 = vector.broadcast %71 : f32 to vector<8x128xf32>
    %73 = arith.mulf %70, %72 : vector<8x128xf32>
    %74 = arith.addf %36, %73 : vector<8x128xf32>
    %c0_28 = arith.constant 0 : index
    %c0_29 = arith.constant 0 : index
    %c0_30 = arith.constant 0 : index
    %75 = vector.load %arg2[%c0_28, %c0_29, %c0_30] : memref<5x8x128xf32, #tpu.memory_space<vmem>>, vector<1x8x128xf32>
    %76 = vector.shape_cast %75 : vector<1x8x128xf32> to vector<8x128xf32>
    %c2_31 = arith.constant 2 : index
    %77 = memref.load %arg1[%c2_31] : memref<71xf32, #tpu.memory_space<smem>>
    %78 = vector.broadcast %77 : f32 to vector<8x128xf32>
    %79 = arith.mulf %76, %78 : vector<8x128xf32>
    %c1_32 = arith.constant 1 : index
    %c0_33 = arith.constant 0 : index
    %c0_34 = arith.constant 0 : index
    %80 = vector.load %arg2[%c1_32, %c0_33, %c0_34] : memref<5x8x128xf32, #tpu.memory_space<vmem>>, vector<1x8x128xf32>
    %81 = vector.shape_cast %80 : vector<1x8x128xf32> to vector<8x128xf32>
    %c12 = arith.constant 12 : index
    %82 = memref.load %arg1[%c12] : memref<71xf32, #tpu.memory_space<smem>>
    %83 = vector.broadcast %82 : f32 to vector<8x128xf32>
    %84 = arith.mulf %81, %83 : vector<8x128xf32>
    %85 = arith.addf %79, %84 : vector<8x128xf32>
    %c2_35 = arith.constant 2 : index
    %c0_36 = arith.constant 0 : index
    %c0_37 = arith.constant 0 : index
    %86 = vector.load %arg2[%c2_35, %c0_36, %c0_37] : memref<5x8x128xf32, #tpu.memory_space<vmem>>, vector<1x8x128xf32>
    %87 = vector.shape_cast %86 : vector<1x8x128xf32> to vector<8x128xf32>
    %c22 = arith.constant 22 : index
    %88 = memref.load %arg1[%c22] : memref<71xf32, #tpu.memory_space<smem>>
    %89 = vector.broadcast %88 : f32 to vector<8x128xf32>
    %90 = arith.mulf %87, %89 : vector<8x128xf32>
    %91 = arith.addf %85, %90 : vector<8x128xf32>
    %c3_38 = arith.constant 3 : index
    %c0_39 = arith.constant 0 : index
    %c0_40 = arith.constant 0 : index
    %92 = vector.load %arg2[%c3_38, %c0_39, %c0_40] : memref<5x8x128xf32, #tpu.memory_space<vmem>>, vector<1x8x128xf32>
    %93 = vector.shape_cast %92 : vector<1x8x128xf32> to vector<8x128xf32>
    %c32 = arith.constant 32 : index
    %94 = memref.load %arg1[%c32] : memref<71xf32, #tpu.memory_space<smem>>
    %95 = vector.broadcast %94 : f32 to vector<8x128xf32>
    %96 = arith.mulf %93, %95 : vector<8x128xf32>
    %97 = arith.addf %91, %96 : vector<8x128xf32>
    %c4_41 = arith.constant 4 : index
    %c0_42 = arith.constant 0 : index
    %c0_43 = arith.constant 0 : index
    %98 = vector.load %arg2[%c4_41, %c0_42, %c0_43] : memref<5x8x128xf32, #tpu.memory_space<vmem>>, vector<1x8x128xf32>
    %99 = vector.shape_cast %98 : vector<1x8x128xf32> to vector<8x128xf32>
    %c42 = arith.constant 42 : index
    %100 = memref.load %arg1[%c42] : memref<71xf32, #tpu.memory_space<smem>>
    %101 = vector.broadcast %100 : f32 to vector<8x128xf32>
    %102 = arith.mulf %99, %101 : vector<8x128xf32>
    %103 = arith.addf %97, %102 : vector<8x128xf32>
    %c52 = arith.constant 52 : index
    %104 = memref.load %arg1[%c52] : memref<71xf32, #tpu.memory_space<smem>>
    %105 = vector.broadcast %104 : f32 to vector<8x128xf32>
    %106 = arith.addf %103, %105 : vector<8x128xf32>
    %cst_44 = arith.constant 0.000000e+00 : f32
    %107 = vector.broadcast %cst_44 : f32 to vector<8x128xf32>
    %108 = arith.maximumf %106, %107 : vector<8x128xf32>
    %c62 = arith.constant 62 : index
    %109 = memref.load %arg1[%c62] : memref<71xf32, #tpu.memory_space<smem>>
    %110 = vector.broadcast %109 : f32 to vector<8x128xf32>
    %111 = arith.mulf %108, %110 : vector<8x128xf32>
    %112 = arith.addf %74, %111 : vector<8x128xf32>
    %c0_45 = arith.constant 0 : index
    %c0_46 = arith.constant 0 : index
    %c0_47 = arith.constant 0 : index
    %113 = vector.load %arg2[%c0_45, %c0_46, %c0_47] : memref<5x8x128xf32, #tpu.memory_space<vmem>>, vector<1x8x128xf32>
    %114 = vector.shape_cast %113 : vector<1x8x128xf32> to vector<8x128xf32>
    %c3_48 = arith.constant 3 : index
    %115 = memref.load %arg1[%c3_48] : memref<71xf32, #tpu.memory_space<smem>>
    %116 = vector.broadcast %115 : f32 to vector<8x128xf32>
    %117 = arith.mulf %114, %116 : vector<8x128xf32>
    %c1_49 = arith.constant 1 : index
    %c0_50 = arith.constant 0 : index
    %c0_51 = arith.constant 0 : index
    %118 = vector.load %arg2[%c1_49, %c0_50, %c0_51] : memref<5x8x128xf32, #tpu.memory_space<vmem>>, vector<1x8x128xf32>
    %119 = vector.shape_cast %118 : vector<1x8x128xf32> to vector<8x128xf32>
    %c13 = arith.constant 13 : index
    %120 = memref.load %arg1[%c13] : memref<71xf32, #tpu.memory_space<smem>>
    %121 = vector.broadcast %120 : f32 to vector<8x128xf32>
    %122 = arith.mulf %119, %121 : vector<8x128xf32>
    %123 = arith.addf %117, %122 : vector<8x128xf32>
    %c2_52 = arith.constant 2 : index
    %c0_53 = arith.constant 0 : index
    %c0_54 = arith.constant 0 : index
    %124 = vector.load %arg2[%c2_52, %c0_53, %c0_54] : memref<5x8x128xf32, #tpu.memory_space<vmem>>, vector<1x8x128xf32>
    %125 = vector.shape_cast %124 : vector<1x8x128xf32> to vector<8x128xf32>
    %c23 = arith.constant 23 : index
    %126 = memref.load %arg1[%c23] : memref<71xf32, #tpu.memory_space<smem>>
    %127 = vector.broadcast %126 : f32 to vector<8x128xf32>
    %128 = arith.mulf %125, %127 : vector<8x128xf32>
    %129 = arith.addf %123, %128 : vector<8x128xf32>
    %c3_55 = arith.constant 3 : index
    %c0_56 = arith.constant 0 : index
    %c0_57 = arith.constant 0 : index
    %130 = vector.load %arg2[%c3_55, %c0_56, %c0_57] : memref<5x8x128xf32, #tpu.memory_space<vmem>>, vector<1x8x128xf32>
    %131 = vector.shape_cast %130 : vector<1x8x128xf32> to vector<8x128xf32>
    %c33 = arith.constant 33 : index
    %132 = memref.load %arg1[%c33] : memref<71xf32, #tpu.memory_space<smem>>
    %133 = vector.broadcast %132 : f32 to vector<8x128xf32>
    %134 = arith.mulf %131, %133 : vector<8x128xf32>
    %135 = arith.addf %129, %134 : vector<8x128xf32>
    %c4_58 = arith.constant 4 : index
    %c0_59 = arith.constant 0 : index
    %c0_60 = arith.constant 0 : index
    %136 = vector.load %arg2[%c4_58, %c0_59, %c0_60] : memref<5x8x128xf32, #tpu.memory_space<vmem>>, vector<1x8x128xf32>
    %137 = vector.shape_cast %136 : vector<1x8x128xf32> to vector<8x128xf32>
    %c43 = arith.constant 43 : index
    %138 = memref.load %arg1[%c43] : memref<71xf32, #tpu.memory_space<smem>>
    %139 = vector.broadcast %138 : f32 to vector<8x128xf32>
    %140 = arith.mulf %137, %139 : vector<8x128xf32>
    %141 = arith.addf %135, %140 : vector<8x128xf32>
    %c53 = arith.constant 53 : index
    %142 = memref.load %arg1[%c53] : memref<71xf32, #tpu.memory_space<smem>>
    %143 = vector.broadcast %142 : f32 to vector<8x128xf32>
    %144 = arith.addf %141, %143 : vector<8x128xf32>
    %cst_61 = arith.constant 0.000000e+00 : f32
    %145 = vector.broadcast %cst_61 : f32 to vector<8x128xf32>
    %146 = arith.maximumf %144, %145 : vector<8x128xf32>
    %c63 = arith.constant 63 : index
    %147 = memref.load %arg1[%c63] : memref<71xf32, #tpu.memory_space<smem>>
    %148 = vector.broadcast %147 : f32 to vector<8x128xf32>
    %149 = arith.mulf %146, %148 : vector<8x128xf32>
    %150 = arith.addf %112, %149 : vector<8x128xf32>
    %c0_62 = arith.constant 0 : index
    %c0_63 = arith.constant 0 : index
    %c0_64 = arith.constant 0 : index
    %151 = vector.load %arg2[%c0_62, %c0_63, %c0_64] : memref<5x8x128xf32, #tpu.memory_space<vmem>>, vector<1x8x128xf32>
    %152 = vector.shape_cast %151 : vector<1x8x128xf32> to vector<8x128xf32>
    %c4_65 = arith.constant 4 : index
    %153 = memref.load %arg1[%c4_65] : memref<71xf32, #tpu.memory_space<smem>>
    %154 = vector.broadcast %153 : f32 to vector<8x128xf32>
    %155 = arith.mulf %152, %154 : vector<8x128xf32>
    %c1_66 = arith.constant 1 : index
    %c0_67 = arith.constant 0 : index
    %c0_68 = arith.constant 0 : index
    %156 = vector.load %arg2[%c1_66, %c0_67, %c0_68] : memref<5x8x128xf32, #tpu.memory_space<vmem>>, vector<1x8x128xf32>
    %157 = vector.shape_cast %156 : vector<1x8x128xf32> to vector<8x128xf32>
    %c14 = arith.constant 14 : index
    %158 = memref.load %arg1[%c14] : memref<71xf32, #tpu.memory_space<smem>>
    %159 = vector.broadcast %158 : f32 to vector<8x128xf32>
    %160 = arith.mulf %157, %159 : vector<8x128xf32>
    %161 = arith.addf %155, %160 : vector<8x128xf32>
    %c2_69 = arith.constant 2 : index
    %c0_70 = arith.constant 0 : index
    %c0_71 = arith.constant 0 : index
    %162 = vector.load %arg2[%c2_69, %c0_70, %c0_71] : memref<5x8x128xf32, #tpu.memory_space<vmem>>, vector<1x8x128xf32>
    %163 = vector.shape_cast %162 : vector<1x8x128xf32> to vector<8x128xf32>
    %c24 = arith.constant 24 : index
    %164 = memref.load %arg1[%c24] : memref<71xf32, #tpu.memory_space<smem>>
    %165 = vector.broadcast %164 : f32 to vector<8x128xf32>
    %166 = arith.mulf %163, %165 : vector<8x128xf32>
    %167 = arith.addf %161, %166 : vector<8x128xf32>
    %c3_72 = arith.constant 3 : index
    %c0_73 = arith.constant 0 : index
    %c0_74 = arith.constant 0 : index
    %168 = vector.load %arg2[%c3_72, %c0_73, %c0_74] : memref<5x8x128xf32, #tpu.memory_space<vmem>>, vector<1x8x128xf32>
    %169 = vector.shape_cast %168 : vector<1x8x128xf32> to vector<8x128xf32>
    %c34 = arith.constant 34 : index
    %170 = memref.load %arg1[%c34] : memref<71xf32, #tpu.memory_space<smem>>
    %171 = vector.broadcast %170 : f32 to vector<8x128xf32>
    %172 = arith.mulf %169, %171 : vector<8x128xf32>
    %173 = arith.addf %167, %172 : vector<8x128xf32>
    %c4_75 = arith.constant 4 : index
    %c0_76 = arith.constant 0 : index
    %c0_77 = arith.constant 0 : index
    %174 = vector.load %arg2[%c4_75, %c0_76, %c0_77] : memref<5x8x128xf32, #tpu.memory_space<vmem>>, vector<1x8x128xf32>
    %175 = vector.shape_cast %174 : vector<1x8x128xf32> to vector<8x128xf32>
    %c44 = arith.constant 44 : index
    %176 = memref.load %arg1[%c44] : memref<71xf32, #tpu.memory_space<smem>>
    %177 = vector.broadcast %176 : f32 to vector<8x128xf32>
    %178 = arith.mulf %175, %177 : vector<8x128xf32>
    %179 = arith.addf %173, %178 : vector<8x128xf32>
    %c54 = arith.constant 54 : index
    %180 = memref.load %arg1[%c54] : memref<71xf32, #tpu.memory_space<smem>>
    %181 = vector.broadcast %180 : f32 to vector<8x128xf32>
    %182 = arith.addf %179, %181 : vector<8x128xf32>
    %cst_78 = arith.constant 0.000000e+00 : f32
    %183 = vector.broadcast %cst_78 : f32 to vector<8x128xf32>
    %184 = arith.maximumf %182, %183 : vector<8x128xf32>
    %c64 = arith.constant 64 : index
    %185 = memref.load %arg1[%c64] : memref<71xf32, #tpu.memory_space<smem>>
    %186 = vector.broadcast %185 : f32 to vector<8x128xf32>
    %187 = arith.mulf %184, %186 : vector<8x128xf32>
    %188 = arith.addf %150, %187 : vector<8x128xf32>
    %c0_79 = arith.constant 0 : index
    %c0_80 = arith.constant 0 : index
    %c0_81 = arith.constant 0 : index
    %189 = vector.load %arg2[%c0_79, %c0_80, %c0_81] : memref<5x8x128xf32, #tpu.memory_space<vmem>>, vector<1x8x128xf32>
    %190 = vector.shape_cast %189 : vector<1x8x128xf32> to vector<8x128xf32>
    %c5 = arith.constant 5 : index
    %191 = memref.load %arg1[%c5] : memref<71xf32, #tpu.memory_space<smem>>
    %192 = vector.broadcast %191 : f32 to vector<8x128xf32>
    %193 = arith.mulf %190, %192 : vector<8x128xf32>
    %c1_82 = arith.constant 1 : index
    %c0_83 = arith.constant 0 : index
    %c0_84 = arith.constant 0 : index
    %194 = vector.load %arg2[%c1_82, %c0_83, %c0_84] : memref<5x8x128xf32, #tpu.memory_space<vmem>>, vector<1x8x128xf32>
    %195 = vector.shape_cast %194 : vector<1x8x128xf32> to vector<8x128xf32>
    %c15 = arith.constant 15 : index
    %196 = memref.load %arg1[%c15] : memref<71xf32, #tpu.memory_space<smem>>
    %197 = vector.broadcast %196 : f32 to vector<8x128xf32>
    %198 = arith.mulf %195, %197 : vector<8x128xf32>
    %199 = arith.addf %193, %198 : vector<8x128xf32>
    %c2_85 = arith.constant 2 : index
    %c0_86 = arith.constant 0 : index
    %c0_87 = arith.constant 0 : index
    %200 = vector.load %arg2[%c2_85, %c0_86, %c0_87] : memref<5x8x128xf32, #tpu.memory_space<vmem>>, vector<1x8x128xf32>
    %201 = vector.shape_cast %200 : vector<1x8x128xf32> to vector<8x128xf32>
    %c25 = arith.constant 25 : index
    %202 = memref.load %arg1[%c25] : memref<71xf32, #tpu.memory_space<smem>>
    %203 = vector.broadcast %202 : f32 to vector<8x128xf32>
    %204 = arith.mulf %201, %203 : vector<8x128xf32>
    %205 = arith.addf %199, %204 : vector<8x128xf32>
    %c3_88 = arith.constant 3 : index
    %c0_89 = arith.constant 0 : index
    %c0_90 = arith.constant 0 : index
    %206 = vector.load %arg2[%c3_88, %c0_89, %c0_90] : memref<5x8x128xf32, #tpu.memory_space<vmem>>, vector<1x8x128xf32>
    %207 = vector.shape_cast %206 : vector<1x8x128xf32> to vector<8x128xf32>
    %c35 = arith.constant 35 : index
    %208 = memref.load %arg1[%c35] : memref<71xf32, #tpu.memory_space<smem>>
    %209 = vector.broadcast %208 : f32 to vector<8x128xf32>
    %210 = arith.mulf %207, %209 : vector<8x128xf32>
    %211 = arith.addf %205, %210 : vector<8x128xf32>
    %c4_91 = arith.constant 4 : index
    %c0_92 = arith.constant 0 : index
    %c0_93 = arith.constant 0 : index
    %212 = vector.load %arg2[%c4_91, %c0_92, %c0_93] : memref<5x8x128xf32, #tpu.memory_space<vmem>>, vector<1x8x128xf32>
    %213 = vector.shape_cast %212 : vector<1x8x128xf32> to vector<8x128xf32>
    %c45 = arith.constant 45 : index
    %214 = memref.load %arg1[%c45] : memref<71xf32, #tpu.memory_space<smem>>
    %215 = vector.broadcast %214 : f32 to vector<8x128xf32>
    %216 = arith.mulf %213, %215 : vector<8x128xf32>
    %217 = arith.addf %211, %216 : vector<8x128xf32>
    %c55 = arith.constant 55 : index
    %218 = memref.load %arg1[%c55] : memref<71xf32, #tpu.memory_space<smem>>
    %219 = vector.broadcast %218 : f32 to vector<8x128xf32>
    %220 = arith.addf %217, %219 : vector<8x128xf32>
    %cst_94 = arith.constant 0.000000e+00 : f32
    %221 = vector.broadcast %cst_94 : f32 to vector<8x128xf32>
    %222 = arith.maximumf %220, %221 : vector<8x128xf32>
    %c65 = arith.constant 65 : index
    %223 = memref.load %arg1[%c65] : memref<71xf32, #tpu.memory_space<smem>>
    %224 = vector.broadcast %223 : f32 to vector<8x128xf32>
    %225 = arith.mulf %222, %224 : vector<8x128xf32>
    %226 = arith.addf %188, %225 : vector<8x128xf32>
    %c0_95 = arith.constant 0 : index
    %c0_96 = arith.constant 0 : index
    %c0_97 = arith.constant 0 : index
    %227 = vector.load %arg2[%c0_95, %c0_96, %c0_97] : memref<5x8x128xf32, #tpu.memory_space<vmem>>, vector<1x8x128xf32>
    %228 = vector.shape_cast %227 : vector<1x8x128xf32> to vector<8x128xf32>
    %c6 = arith.constant 6 : index
    %229 = memref.load %arg1[%c6] : memref<71xf32, #tpu.memory_space<smem>>
    %230 = vector.broadcast %229 : f32 to vector<8x128xf32>
    %231 = arith.mulf %228, %230 : vector<8x128xf32>
    %c1_98 = arith.constant 1 : index
    %c0_99 = arith.constant 0 : index
    %c0_100 = arith.constant 0 : index
    %232 = vector.load %arg2[%c1_98, %c0_99, %c0_100] : memref<5x8x128xf32, #tpu.memory_space<vmem>>, vector<1x8x128xf32>
    %233 = vector.shape_cast %232 : vector<1x8x128xf32> to vector<8x128xf32>
    %c16 = arith.constant 16 : index
    %234 = memref.load %arg1[%c16] : memref<71xf32, #tpu.memory_space<smem>>
    %235 = vector.broadcast %234 : f32 to vector<8x128xf32>
    %236 = arith.mulf %233, %235 : vector<8x128xf32>
    %237 = arith.addf %231, %236 : vector<8x128xf32>
    %c2_101 = arith.constant 2 : index
    %c0_102 = arith.constant 0 : index
    %c0_103 = arith.constant 0 : index
    %238 = vector.load %arg2[%c2_101, %c0_102, %c0_103] : memref<5x8x128xf32, #tpu.memory_space<vmem>>, vector<1x8x128xf32>
    %239 = vector.shape_cast %238 : vector<1x8x128xf32> to vector<8x128xf32>
    %c26 = arith.constant 26 : index
    %240 = memref.load %arg1[%c26] : memref<71xf32, #tpu.memory_space<smem>>
    %241 = vector.broadcast %240 : f32 to vector<8x128xf32>
    %242 = arith.mulf %239, %241 : vector<8x128xf32>
    %243 = arith.addf %237, %242 : vector<8x128xf32>
    %c3_104 = arith.constant 3 : index
    %c0_105 = arith.constant 0 : index
    %c0_106 = arith.constant 0 : index
    %244 = vector.load %arg2[%c3_104, %c0_105, %c0_106] : memref<5x8x128xf32, #tpu.memory_space<vmem>>, vector<1x8x128xf32>
    %245 = vector.shape_cast %244 : vector<1x8x128xf32> to vector<8x128xf32>
    %c36 = arith.constant 36 : index
    %246 = memref.load %arg1[%c36] : memref<71xf32, #tpu.memory_space<smem>>
    %247 = vector.broadcast %246 : f32 to vector<8x128xf32>
    %248 = arith.mulf %245, %247 : vector<8x128xf32>
    %249 = arith.addf %243, %248 : vector<8x128xf32>
    %c4_107 = arith.constant 4 : index
    %c0_108 = arith.constant 0 : index
    %c0_109 = arith.constant 0 : index
    %250 = vector.load %arg2[%c4_107, %c0_108, %c0_109] : memref<5x8x128xf32, #tpu.memory_space<vmem>>, vector<1x8x128xf32>
    %251 = vector.shape_cast %250 : vector<1x8x128xf32> to vector<8x128xf32>
    %c46 = arith.constant 46 : index
    %252 = memref.load %arg1[%c46] : memref<71xf32, #tpu.memory_space<smem>>
    %253 = vector.broadcast %252 : f32 to vector<8x128xf32>
    %254 = arith.mulf %251, %253 : vector<8x128xf32>
    %255 = arith.addf %249, %254 : vector<8x128xf32>
    %c56 = arith.constant 56 : index
    %256 = memref.load %arg1[%c56] : memref<71xf32, #tpu.memory_space<smem>>
    %257 = vector.broadcast %256 : f32 to vector<8x128xf32>
    %258 = arith.addf %255, %257 : vector<8x128xf32>
    %cst_110 = arith.constant 0.000000e+00 : f32
    %259 = vector.broadcast %cst_110 : f32 to vector<8x128xf32>
    %260 = arith.maximumf %258, %259 : vector<8x128xf32>
    %c66 = arith.constant 66 : index
    %261 = memref.load %arg1[%c66] : memref<71xf32, #tpu.memory_space<smem>>
    %262 = vector.broadcast %261 : f32 to vector<8x128xf32>
    %263 = arith.mulf %260, %262 : vector<8x128xf32>
    %264 = arith.addf %226, %263 : vector<8x128xf32>
    %c0_111 = arith.constant 0 : index
    %c0_112 = arith.constant 0 : index
    %c0_113 = arith.constant 0 : index
    %265 = vector.load %arg2[%c0_111, %c0_112, %c0_113] : memref<5x8x128xf32, #tpu.memory_space<vmem>>, vector<1x8x128xf32>
    %266 = vector.shape_cast %265 : vector<1x8x128xf32> to vector<8x128xf32>
    %c7 = arith.constant 7 : index
    %267 = memref.load %arg1[%c7] : memref<71xf32, #tpu.memory_space<smem>>
    %268 = vector.broadcast %267 : f32 to vector<8x128xf32>
    %269 = arith.mulf %266, %268 : vector<8x128xf32>
    %c1_114 = arith.constant 1 : index
    %c0_115 = arith.constant 0 : index
    %c0_116 = arith.constant 0 : index
    %270 = vector.load %arg2[%c1_114, %c0_115, %c0_116] : memref<5x8x128xf32, #tpu.memory_space<vmem>>, vector<1x8x128xf32>
    %271 = vector.shape_cast %270 : vector<1x8x128xf32> to vector<8x128xf32>
    %c17 = arith.constant 17 : index
    %272 = memref.load %arg1[%c17] : memref<71xf32, #tpu.memory_space<smem>>
    %273 = vector.broadcast %272 : f32 to vector<8x128xf32>
    %274 = arith.mulf %271, %273 : vector<8x128xf32>
    %275 = arith.addf %269, %274 : vector<8x128xf32>
    %c2_117 = arith.constant 2 : index
    %c0_118 = arith.constant 0 : index
    %c0_119 = arith.constant 0 : index
    %276 = vector.load %arg2[%c2_117, %c0_118, %c0_119] : memref<5x8x128xf32, #tpu.memory_space<vmem>>, vector<1x8x128xf32>
    %277 = vector.shape_cast %276 : vector<1x8x128xf32> to vector<8x128xf32>
    %c27 = arith.constant 27 : index
    %278 = memref.load %arg1[%c27] : memref<71xf32, #tpu.memory_space<smem>>
    %279 = vector.broadcast %278 : f32 to vector<8x128xf32>
    %280 = arith.mulf %277, %279 : vector<8x128xf32>
    %281 = arith.addf %275, %280 : vector<8x128xf32>
    %c3_120 = arith.constant 3 : index
    %c0_121 = arith.constant 0 : index
    %c0_122 = arith.constant 0 : index
    %282 = vector.load %arg2[%c3_120, %c0_121, %c0_122] : memref<5x8x128xf32, #tpu.memory_space<vmem>>, vector<1x8x128xf32>
    %283 = vector.shape_cast %282 : vector<1x8x128xf32> to vector<8x128xf32>
    %c37 = arith.constant 37 : index
    %284 = memref.load %arg1[%c37] : memref<71xf32, #tpu.memory_space<smem>>
    %285 = vector.broadcast %284 : f32 to vector<8x128xf32>
    %286 = arith.mulf %283, %285 : vector<8x128xf32>
    %287 = arith.addf %281, %286 : vector<8x128xf32>
    %c4_123 = arith.constant 4 : index
    %c0_124 = arith.constant 0 : index
    %c0_125 = arith.constant 0 : index
    %288 = vector.load %arg2[%c4_123, %c0_124, %c0_125] : memref<5x8x128xf32, #tpu.memory_space<vmem>>, vector<1x8x128xf32>
    %289 = vector.shape_cast %288 : vector<1x8x128xf32> to vector<8x128xf32>
    %c47 = arith.constant 47 : index
    %290 = memref.load %arg1[%c47] : memref<71xf32, #tpu.memory_space<smem>>
    %291 = vector.broadcast %290 : f32 to vector<8x128xf32>
    %292 = arith.mulf %289, %291 : vector<8x128xf32>
    %293 = arith.addf %287, %292 : vector<8x128xf32>
    %c57 = arith.constant 57 : index
    %294 = memref.load %arg1[%c57] : memref<71xf32, #tpu.memory_space<smem>>
    %295 = vector.broadcast %294 : f32 to vector<8x128xf32>
    %296 = arith.addf %293, %295 : vector<8x128xf32>
    %cst_126 = arith.constant 0.000000e+00 : f32
    %297 = vector.broadcast %cst_126 : f32 to vector<8x128xf32>
    %298 = arith.maximumf %296, %297 : vector<8x128xf32>
    %c67 = arith.constant 67 : index
    %299 = memref.load %arg1[%c67] : memref<71xf32, #tpu.memory_space<smem>>
    %300 = vector.broadcast %299 : f32 to vector<8x128xf32>
    %301 = arith.mulf %298, %300 : vector<8x128xf32>
    %302 = arith.addf %264, %301 : vector<8x128xf32>
    %c0_127 = arith.constant 0 : index
    %c0_128 = arith.constant 0 : index
    %c0_129 = arith.constant 0 : index
    %303 = vector.load %arg2[%c0_127, %c0_128, %c0_129] : memref<5x8x128xf32, #tpu.memory_space<vmem>>, vector<1x8x128xf32>
    %304 = vector.shape_cast %303 : vector<1x8x128xf32> to vector<8x128xf32>
    %c8 = arith.constant 8 : index
    %305 = memref.load %arg1[%c8] : memref<71xf32, #tpu.memory_space<smem>>
    %306 = vector.broadcast %305 : f32 to vector<8x128xf32>
    %307 = arith.mulf %304, %306 : vector<8x128xf32>
    %c1_130 = arith.constant 1 : index
    %c0_131 = arith.constant 0 : index
    %c0_132 = arith.constant 0 : index
    %308 = vector.load %arg2[%c1_130, %c0_131, %c0_132] : memref<5x8x128xf32, #tpu.memory_space<vmem>>, vector<1x8x128xf32>
    %309 = vector.shape_cast %308 : vector<1x8x128xf32> to vector<8x128xf32>
    %c18 = arith.constant 18 : index
    %310 = memref.load %arg1[%c18] : memref<71xf32, #tpu.memory_space<smem>>
    %311 = vector.broadcast %310 : f32 to vector<8x128xf32>
    %312 = arith.mulf %309, %311 : vector<8x128xf32>
    %313 = arith.addf %307, %312 : vector<8x128xf32>
    %c2_133 = arith.constant 2 : index
    %c0_134 = arith.constant 0 : index
    %c0_135 = arith.constant 0 : index
    %314 = vector.load %arg2[%c2_133, %c0_134, %c0_135] : memref<5x8x128xf32, #tpu.memory_space<vmem>>, vector<1x8x128xf32>
    %315 = vector.shape_cast %314 : vector<1x8x128xf32> to vector<8x128xf32>
    %c28 = arith.constant 28 : index
    %316 = memref.load %arg1[%c28] : memref<71xf32, #tpu.memory_space<smem>>
    %317 = vector.broadcast %316 : f32 to vector<8x128xf32>
    %318 = arith.mulf %315, %317 : vector<8x128xf32>
    %319 = arith.addf %313, %318 : vector<8x128xf32>
    %c3_136 = arith.constant 3 : index
    %c0_137 = arith.constant 0 : index
    %c0_138 = arith.constant 0 : index
    %320 = vector.load %arg2[%c3_136, %c0_137, %c0_138] : memref<5x8x128xf32, #tpu.memory_space<vmem>>, vector<1x8x128xf32>
    %321 = vector.shape_cast %320 : vector<1x8x128xf32> to vector<8x128xf32>
    %c38 = arith.constant 38 : index
    %322 = memref.load %arg1[%c38] : memref<71xf32, #tpu.memory_space<smem>>
    %323 = vector.broadcast %322 : f32 to vector<8x128xf32>
    %324 = arith.mulf %321, %323 : vector<8x128xf32>
    %325 = arith.addf %319, %324 : vector<8x128xf32>
    %c4_139 = arith.constant 4 : index
    %c0_140 = arith.constant 0 : index
    %c0_141 = arith.constant 0 : index
    %326 = vector.load %arg2[%c4_139, %c0_140, %c0_141] : memref<5x8x128xf32, #tpu.memory_space<vmem>>, vector<1x8x128xf32>
    %327 = vector.shape_cast %326 : vector<1x8x128xf32> to vector<8x128xf32>
    %c48 = arith.constant 48 : index
    %328 = memref.load %arg1[%c48] : memref<71xf32, #tpu.memory_space<smem>>
    %329 = vector.broadcast %328 : f32 to vector<8x128xf32>
    %330 = arith.mulf %327, %329 : vector<8x128xf32>
    %331 = arith.addf %325, %330 : vector<8x128xf32>
    %c58 = arith.constant 58 : index
    %332 = memref.load %arg1[%c58] : memref<71xf32, #tpu.memory_space<smem>>
    %333 = vector.broadcast %332 : f32 to vector<8x128xf32>
    %334 = arith.addf %331, %333 : vector<8x128xf32>
    %cst_142 = arith.constant 0.000000e+00 : f32
    %335 = vector.broadcast %cst_142 : f32 to vector<8x128xf32>
    %336 = arith.maximumf %334, %335 : vector<8x128xf32>
    %c68 = arith.constant 68 : index
    %337 = memref.load %arg1[%c68] : memref<71xf32, #tpu.memory_space<smem>>
    %338 = vector.broadcast %337 : f32 to vector<8x128xf32>
    %339 = arith.mulf %336, %338 : vector<8x128xf32>
    %340 = arith.addf %302, %339 : vector<8x128xf32>
    %c0_143 = arith.constant 0 : index
    %c0_144 = arith.constant 0 : index
    %c0_145 = arith.constant 0 : index
    %341 = vector.load %arg2[%c0_143, %c0_144, %c0_145] : memref<5x8x128xf32, #tpu.memory_space<vmem>>, vector<1x8x128xf32>
    %342 = vector.shape_cast %341 : vector<1x8x128xf32> to vector<8x128xf32>
    %c9 = arith.constant 9 : index
    %343 = memref.load %arg1[%c9] : memref<71xf32, #tpu.memory_space<smem>>
    %344 = vector.broadcast %343 : f32 to vector<8x128xf32>
    %345 = arith.mulf %342, %344 : vector<8x128xf32>
    %c1_146 = arith.constant 1 : index
    %c0_147 = arith.constant 0 : index
    %c0_148 = arith.constant 0 : index
    %346 = vector.load %arg2[%c1_146, %c0_147, %c0_148] : memref<5x8x128xf32, #tpu.memory_space<vmem>>, vector<1x8x128xf32>
    %347 = vector.shape_cast %346 : vector<1x8x128xf32> to vector<8x128xf32>
    %c19 = arith.constant 19 : index
    %348 = memref.load %arg1[%c19] : memref<71xf32, #tpu.memory_space<smem>>
    %349 = vector.broadcast %348 : f32 to vector<8x128xf32>
    %350 = arith.mulf %347, %349 : vector<8x128xf32>
    %351 = arith.addf %345, %350 : vector<8x128xf32>
    %c2_149 = arith.constant 2 : index
    %c0_150 = arith.constant 0 : index
    %c0_151 = arith.constant 0 : index
    %352 = vector.load %arg2[%c2_149, %c0_150, %c0_151] : memref<5x8x128xf32, #tpu.memory_space<vmem>>, vector<1x8x128xf32>
    %353 = vector.shape_cast %352 : vector<1x8x128xf32> to vector<8x128xf32>
    %c29 = arith.constant 29 : index
    %354 = memref.load %arg1[%c29] : memref<71xf32, #tpu.memory_space<smem>>
    %355 = vector.broadcast %354 : f32 to vector<8x128xf32>
    %356 = arith.mulf %353, %355 : vector<8x128xf32>
    %357 = arith.addf %351, %356 : vector<8x128xf32>
    %c3_152 = arith.constant 3 : index
    %c0_153 = arith.constant 0 : index
    %c0_154 = arith.constant 0 : index
    %358 = vector.load %arg2[%c3_152, %c0_153, %c0_154] : memref<5x8x128xf32, #tpu.memory_space<vmem>>, vector<1x8x128xf32>
    %359 = vector.shape_cast %358 : vector<1x8x128xf32> to vector<8x128xf32>
    %c39 = arith.constant 39 : index
    %360 = memref.load %arg1[%c39] : memref<71xf32, #tpu.memory_space<smem>>
    %361 = vector.broadcast %360 : f32 to vector<8x128xf32>
    %362 = arith.mulf %359, %361 : vector<8x128xf32>
    %363 = arith.addf %357, %362 : vector<8x128xf32>
    %c4_155 = arith.constant 4 : index
    %c0_156 = arith.constant 0 : index
    %c0_157 = arith.constant 0 : index
    %364 = vector.load %arg2[%c4_155, %c0_156, %c0_157] : memref<5x8x128xf32, #tpu.memory_space<vmem>>, vector<1x8x128xf32>
    %365 = vector.shape_cast %364 : vector<1x8x128xf32> to vector<8x128xf32>
    %c49 = arith.constant 49 : index
    %366 = memref.load %arg1[%c49] : memref<71xf32, #tpu.memory_space<smem>>
    %367 = vector.broadcast %366 : f32 to vector<8x128xf32>
    %368 = arith.mulf %365, %367 : vector<8x128xf32>
    %369 = arith.addf %363, %368 : vector<8x128xf32>
    %c59 = arith.constant 59 : index
    %370 = memref.load %arg1[%c59] : memref<71xf32, #tpu.memory_space<smem>>
    %371 = vector.broadcast %370 : f32 to vector<8x128xf32>
    %372 = arith.addf %369, %371 : vector<8x128xf32>
    %cst_158 = arith.constant 0.000000e+00 : f32
    %373 = vector.broadcast %cst_158 : f32 to vector<8x128xf32>
    %374 = arith.maximumf %372, %373 : vector<8x128xf32>
    %c69 = arith.constant 69 : index
    %375 = memref.load %arg1[%c69] : memref<71xf32, #tpu.memory_space<smem>>
    %376 = vector.broadcast %375 : f32 to vector<8x128xf32>
    %377 = arith.mulf %374, %376 : vector<8x128xf32>
    %378 = arith.addf %340, %377 : vector<8x128xf32>
    %c70 = arith.constant 70 : index
    %379 = memref.load %arg1[%c70] : memref<71xf32, #tpu.memory_space<smem>>
    %380 = vector.broadcast %379 : f32 to vector<8x128xf32>
    %381 = arith.addf %378, %380 : vector<8x128xf32>
    %c0_159 = arith.constant 0 : index
    %c0_160 = arith.constant 0 : index
    %382 = vector.load %arg3[%c0_159, %c0_160] : memref<8x128xf32, #tpu.memory_space<vmem>>, vector<8x128xf32>
    tpu.vector_store %arg3[%c0_159, %c0_160], %381 {strides = array<i32>} : memref<8x128xf32, #tpu.memory_space<vmem>>, vector<8x128xf32>,
    return
  }
  func.func @transform_0(%arg0: i32) -> i32 {
    %c0_i32 = arith.constant 0 : i32
    %c0_i32_0 = arith.constant 0 : i32
    return %c0_i32 : i32
  }
  func.func @transform_1(%arg0: i32) -> (i32, i32, i32) {
    %c0_i32 = arith.constant 0 : i32
    %c0_i32_0 = arith.constant 0 : i32
    %c0_i32_1 = arith.constant 0 : i32
    return %c0_i32, %arg0, %c0_i32_0 : i32, i32, i32
  }
  func.func @transform_2(%arg0: i32) -> (i32, i32) {
    %c0_i32 = arith.constant 0 : i32
    %c0_i32_0 = arith.constant 0 : i32
    return %arg0, %c0_i32 : i32, i32
  }
}

</mosaic_0001>

<llo_original>
// kernel: mlp_forward.1
$region0: #{mlp_forward.1}
  #allocation0 [shape = 'u32[]', space=smem, size = 0x4, offset = 0x4, fixed_abs, tag = 'smem constant byte address 0x4 - core index']
  #allocation1 [shape = 'u32[144,128]{1,0:T(1,128)}', space=vmem, size = 0x12000, scoped, tag = 'internal scratch']
  %s0 = inlined_call_operand.vmem [shape: f32[71], index: 0, kind: input, shape index: {}]
  %s1 = inlined_call_operand.vmem [shape: f32[5,8,128], index: 1, kind: input, shape index: {}]
  %s2 = inlined_call_operand.vmem [shape: f32[8,128], index: 2, kind: output, shape index: {}]
  %s3 = sld [smem:[#allocation0]]
  $region22: #{mlp_forward.1} parent=0
    _
  %s5 = ssub.s32 1, %s3
  %s6 = scalar_select 0, %s5, %s3
  $region1: #{mlp_forward.1} parent=0
    #allocation2 [shape = 'u8[512]{0}', space=smem, size = 0x200, scoped, tag = 'input window, operand 0, single buffered']
    #allocation3 [shape = 's32[1]{0}', space=sflag, size = 0x4, scoped, tag = 'scoped memory for mlp_forward.1']
    %7 = vsyncpa [#allocation3], 0
    // Predicated region
    $region2: #{mlp_forward.1} parent=1 // pred_check
      _
    $region3: #{mlp_forward.1} parent=1 // pred_check_branch
      %9 = sbr.rel (0) target = $region5
    $region4: #{mlp_forward.1} parent=1 // pred_region
      %s11 = ssub.s32 16, 16
      %12 = vsyncadd [#allocation3], %s11
      %s14 = sshll.u32 %s0, 4
      %s15 = int_to_ptr.vmem [resolvable:$true] %s14
      %17 = dma.vmem_to_smem %s15, 16, [#allocation2], [#allocation3]
    $region5: #{mlp_forward.1} parent=1 // pred_fallthru
      _
    // Predicated region
    $region6: #{mlp_forward.1} parent=1 // pred_check
      _
    $region7: #{mlp_forward.1} parent=1 // pred_check_branch
      %19 = sbr.rel (0) target = $region9
    $region8: #{mlp_forward.1} parent=1 // pred_region
      _
    $region9: #{mlp_forward.1} parent=1 // pred_fallthru
      _
    // Predicated region
    $region10: #{mlp_forward.1} parent=1 // pred_check
      _
    $region11: #{mlp_forward.1} parent=1 // pred_check_branch
      %21 = sbr.rel (0) target = $region13
    $region12: #{mlp_forward.1} parent=1 // pred_region
      %22 = dma.done [#allocation3], 16
    $region13: #{mlp_forward.1} parent=1 // pred_fallthru
      _
    %23 = sfence
    %v24 = vld [vmem:[%s1] sm:$0xff]
    %s25 = sld [smem:[#allocation2]]
    %v26 = vstv %s25
    %v27 = vmul.f32 %v24, %v26
    %s28 = scalar_lea.vmem %s1, 8
    %v29 = vld [vmem:[%s28] sm:$0xff]
    %s30 = sld [smem:[#allocation2 + $0xa]]
    %v31 = vstv %s30
    %v32 = vmul.f32 %v29, %v31
    %v33 = vadd.f32 %v27, %v32
    %s34 = scalar_lea.vmem %s1, 16
    %v35 = vld [vmem:[%s34] sm:$0xff]
    %s36 = sld [smem:[#allocation2 + $0x14]]
    %v37 = vstv %s36
    %v38 = vmul.f32 %v35, %v37
    %v39 = vadd.f32 %v33, %v38
    %s40 = scalar_lea.vmem %s1, 24
    %v41 = vld [vmem:[%s40] sm:$0xff]
    %s42 = sld [smem:[#allocation2 + $0x1e]]
    %v43 = vstv %s42
    %v44 = vmul.f32 %v41, %v43
    %v45 = vadd.f32 %v39, %v44
    %s46 = scalar_lea.vmem %s1, 32
    %v47 = vld [vmem:[%s46] sm:$0xff]
    %s48 = sld [smem:[#allocation2 + $0x28]]
    %v49 = vstv %s48
    %v50 = vmul.f32 %v47, %v49
    %v51 = vadd.f32 %v45, %v50
    %s52 = sld [smem:[#allocation2 + $0x32]]
    %v53 = vstv %s52
    %v54 = vadd.f32 %v51, %v53
    %v55 = vmax.f32 %v54, 0.0
    %s56 = sld [smem:[#allocation2 + $0x3c]]
    %v57 = vstv %s56
    %v58 = vmul.f32 %v55, %v57
    %s59 = sld [smem:[#allocation2 + $0x1]]
    %v60 = vstv %s59
    %v61 = vmul.f32 %v24, %v60
    %s62 = sld [smem:[#allocation2 + $0xb]]
    %v63 = vstv %s62
    %v64 = vmul.f32 %v29, %v63
    %v65 = vadd.f32 %v61, %v64
    %s66 = sld [smem:[#allocation2 + $0x15]]
    %v67 = vstv %s66
    %v68 = vmul.f32 %v35, %v67
    %v69 = vadd.f32 %v65, %v68
    %s70 = sld [smem:[#allocation2 + $0x1f]]
    %v71 = vstv %s70
    %v72 = vmul.f32 %v41, %v71
    %v73 = vadd.f32 %v69, %v72
    %s74 = sld [smem:[#allocation2 + $0x29]]
    %v75 = vstv %s74
    %v76 = vmul.f32 %v47, %v75
    %v77 = vadd.f32 %v73, %v76
    %s78 = sld [smem:[#allocation2 + $0x33]]
    %v79 = vstv %s78
    %v80 = vadd.f32 %v77, %v79
    %v81 = vmax.f32 %v80, 0.0
    %s82 = sld [smem:[#allocation2 + $0x3d]]
    %v83 = vstv %s82
    %v84 = vmul.f32 %v81, %v83
    %v85 = vadd.f32 %v58, %v84
    %s86 = sld [smem:[#allocation2 + $0x2]]
    %v87 = vstv %s86
    %v88 = vmul.f32 %v24, %v87
    %s89 = sld [smem:[#allocation2 + $0xc]]
    %v90 = vstv %s89
    %v91 = vmul.f32 %v29, %v90
    %v92 = vadd.f32 %v88, %v91
    %s93 = sld [smem:[#allocation2 + $0x16]]
    %v94 = vstv %s93
    %v95 = vmul.f32 %v35, %v94
    %v96 = vadd.f32 %v92, %v95
    %s97 = sld [smem:[#allocation2 + $0x20]]
    %v98 = vstv %s97
    %v99 = vmul.f32 %v41, %v98
    %v100 = vadd.f32 %v96, %v99
    %s101 = sld [smem:[#allocation2 + $0x2a]]
    %v102 = vstv %s101
    %v103 = vmul.f32 %v47, %v102
    %v104 = vadd.f32 %v100, %v103
    %s105 = sld [smem:[#allocation2 + $0x34]]
    %v106 = vstv %s105
    %v107 = vadd.f32 %v104, %v106
    %v108 = vmax.f32 %v107, 0.0
    %s109 = sld [smem:[#allocation2 + $0x3e]]
    %v110 = vstv %s109
    %v111 = vmul.f32 %v108, %v110
    %v112 = vadd.f32 %v85, %v111
    %s113 = sld [smem:[#allocation2 + $0x3]]
    %v114 = vstv %s113
    %v115 = vmul.f32 %v24, %v114
    %s116 = sld [smem:[#allocation2 + $0xd]]
    %v117 = vstv %s116
    %v118 = vmul.f32 %v29, %v117
    %v119 = vadd.f32 %v115, %v118
    %s120 = sld [smem:[#allocation2 + $0x17]]
    %v121 = vstv %s120
    %v122 = vmul.f32 %v35, %v121
    %v123 = vadd.f32 %v119, %v122
    %s124 = sld [smem:[#allocation2 + $0x21]]
    %v125 = vstv %s124
    %v126 = vmul.f32 %v41, %v125
    %v127 = vadd.f32 %v123, %v126
    %s128 = sld [smem:[#allocation2 + $0x2b]]
    %v129 = vstv %s128
    %v130 = vmul.f32 %v47, %v129
    %v131 = vadd.f32 %v127, %v130
    %s132 = sld [smem:[#allocation2 + $0x35]]
    %v133 = vstv %s132
    %v134 = vadd.f32 %v131, %v133
    %v135 = vmax.f32 %v134, 0.0
    %s136 = sld [smem:[#allocation2 + $0x3f]]
    %v137 = vstv %s136
    %v138 = vmul.f32 %v135, %v137
    %v139 = vadd.f32 %v112, %v138
    %s140 = sld [smem:[#allocation2 + $0x4]]
    %v141 = vstv %s140
    %v142 = vmul.f32 %v24, %v141
    %s143 = sld [smem:[#allocation2 + $0xe]]
    %v144 = vstv %s143
    %v145 = vmul.f32 %v29, %v144
    %v146 = vadd.f32 %v142, %v145
    %s147 = sld [smem:[#allocation2 + $0x18]]
    %v148 = vstv %s147
    %v149 = vmul.f32 %v35, %v148
    %v150 = vadd.f32 %v146, %v149
    %s151 = sld [smem:[#allocation2 + $0x22]]
    %v152 = vstv %s151
    %v153 = vmul.f32 %v41, %v152
    %v154 = vadd.f32 %v150, %v153
    %s155 = sld [smem:[#allocation2 + $0x2c]]
    %v156 = vstv %s155
    %v157 = vmul.f32 %v47, %v156
    %v158 = vadd.f32 %v154, %v157
    %s159 = sld [smem:[#allocation2 + $0x36]]
    %v160 = vstv %s159
    %v161 = vadd.f32 %v158, %v160
    %v162 = vmax.f32 %v161, 0.0
    %s163 = sld [smem:[#allocation2 + $0x40]]
    %v164 = vstv %s163
    %v165 = vmul.f32 %v162, %v164
    %v166 = vadd.f32 %v139, %v165
    %s167 = sld [smem:[#allocation2 + $0x5]]
    %v168 = vstv %s167
    %v169 = vmul.f32 %v24, %v168
    %s170 = sld [smem:[#allocation2 + $0xf]]
    %v171 = vstv %s170
    %v172 = vmul.f32 %v29, %v171
    %v173 = vadd.f32 %v169, %v172
    %s174 = sld [smem:[#allocation2 + $0x19]]
    %v175 = vstv %s174
    %v176 = vmul.f32 %v35, %v175
    %v177 = vadd.f32 %v173, %v176
    %s178 = sld [smem:[#allocation2 + $0x23]]
    %v179 = vstv %s178
    %v180 = vmul.f32 %v41, %v179
    %v181 = vadd.f32 %v177, %v180
    %s182 = sld [smem:[#allocation2 + $0x2d]]
    %v183 = vstv %s182
    %v184 = vmul.f32 %v47, %v183
    %v185 = vadd.f32 %v181, %v184
    %s186 = sld [smem:[#allocation2 + $0x37]]
    %v187 = vstv %s186
    %v188 = vadd.f32 %v185, %v187
    %v189 = vmax.f32 %v188, 0.0
    %s190 = sld [smem:[#allocation2 + $0x41]]
    %v191 = vstv %s190
    %v192 = vmul.f32 %v189, %v191
    %v193 = vadd.f32 %v166, %v192
    %s194 = sld [smem:[#allocation2 + $0x6]]
    %v195 = vstv %s194
    %v196 = vmul.f32 %v24, %v195
    %s197 = sld [smem:[#allocation2 + $0x10]]
    %v198 = vstv %s197
    %v199 = vmul.f32 %v29, %v198
    %v200 = vadd.f32 %v196, %v199
    %s201 = sld [smem:[#allocation2 + $0x1a]]
    %v202 = vstv %s201
    %v203 = vmul.f32 %v35, %v202
    %v204 = vadd.f32 %v200, %v203
    %s205 = sld [smem:[#allocation2 + $0x24]]
    %v206 = vstv %s205
    %v207 = vmul.f32 %v41, %v206
    %v208 = vadd.f32 %v204, %v207
    %s209 = sld [smem:[#allocation2 + $0x2e]]
    %v210 = vstv %s209
    %v211 = vmul.f32 %v47, %v210
    %v212 = vadd.f32 %v208, %v211
    %s213 = sld [smem:[#allocation2 + $0x38]]
    %v214 = vstv %s213
    %v215 = vadd.f32 %v212, %v214
    %v216 = vmax.f32 %v215, 0.0
    %s217 = sld [smem:[#allocation2 + $0x42]]
    %v218 = vstv %s217
    %v219 = vmul.f32 %v216, %v218
    %v220 = vadd.f32 %v193, %v219
    %s221 = sld [smem:[#allocation2 + $0x7]]
    %v222 = vstv %s221
    %v223 = vmul.f32 %v24, %v222
    %s224 = sld [smem:[#allocation2 + $0x11]]
    %v225 = vstv %s224
    %v226 = vmul.f32 %v29, %v225
    %v227 = vadd.f32 %v223, %v226
    %s228 = sld [smem:[#allocation2 + $0x1b]]
    %v229 = vstv %s228
    %v230 = vmul.f32 %v35, %v229
    %v231 = vadd.f32 %v227, %v230
    %s232 = sld [smem:[#allocation2 + $0x25]]
    %v233 = vstv %s232
    %v234 = vmul.f32 %v41, %v233
    %v235 = vadd.f32 %v231, %v234
    %s236 = sld [smem:[#allocation2 + $0x2f]]
    %v237 = vstv %s236
    %v238 = vmul.f32 %v47, %v237
    %v239 = vadd.f32 %v235, %v238
    %s240 = sld [smem:[#allocation2 + $0x39]]
    %v241 = vstv %s240
    %v242 = vadd.f32 %v239, %v241
    %v243 = vmax.f32 %v242, 0.0
    %s244 = sld [smem:[#allocation2 + $0x43]]
    %v245 = vstv %s244
    %v246 = vmul.f32 %v243, %v245
    %v247 = vadd.f32 %v220, %v246
    %s248 = sld [smem:[#allocation2 + $0x8]]
    %v249 = vstv %s248
    %v250 = vmul.f32 %v24, %v249
    %s251 = sld [smem:[#allocation2 + $0x12]]
    %v252 = vstv %s251
    %v253 = vmul.f32 %v29, %v252
    %v254 = vadd.f32 %v250, %v253
    %s255 = sld [smem:[#allocation2 + $0x1c]]
    %v256 = vstv %s255
    %v257 = vmul.f32 %v35, %v256
    %v258 = vadd.f32 %v254, %v257
    %s259 = sld [smem:[#allocation2 + $0x26]]
    %v260 = vstv %s259
    %v261 = vmul.f32 %v41, %v260
    %v262 = vadd.f32 %v258, %v261
    %s263 = sld [smem:[#allocation2 + $0x30]]
    %v264 = vstv %s263
    %v265 = vmul.f32 %v47, %v264
    %v266 = vadd.f32 %v262, %v265
    %s267 = sld [smem:[#allocation2 + $0x3a]]
    %v268 = vstv %s267
    %v269 = vadd.f32 %v266, %v268
    %v270 = vmax.f32 %v269, 0.0
    %s271 = sld [smem:[#allocation2 + $0x44]]
    %v272 = vstv %s271
    %v273 = vmul.f32 %v270, %v272
    %v274 = vadd.f32 %v247, %v273
    %s275 = sld [smem:[#allocation2 + $0x9]]
    %v276 = vstv %s275
    %v277 = vmul.f32 %v24, %v276
    %s278 = sld [smem:[#allocation2 + $0x13]]
    %v279 = vstv %s278
    %v280 = vmul.f32 %v29, %v279
    %v281 = vadd.f32 %v277, %v280
    %s282 = sld [smem:[#allocation2 + $0x1d]]
    %v283 = vstv %s282
    %v284 = vmul.f32 %v35, %v283
    %v285 = vadd.f32 %v281, %v284
    %s286 = sld [smem:[#allocation2 + $0x27]]
    %v287 = vstv %s286
    %v288 = vmul.f32 %v41, %v287
    %v289 = vadd.f32 %v285, %v288
    %s290 = sld [smem:[#allocation2 + $0x31]]
    %v291 = vstv %s290
    %v292 = vmul.f32 %v47, %v291
    %v293 = vadd.f32 %v289, %v292
    %s294 = sld [smem:[#allocation2 + $0x3b]]
    %v295 = vstv %s294
    %v296 = vadd.f32 %v293, %v295
    %v297 = vmax.f32 %v296, 0.0
    %s298 = sld [smem:[#allocation2 + $0x45]]
    %v299 = vstv %s298
    %v300 = vmul.f32 %v297, %v299
    %v301 = vadd.f32 %v274, %v300
    %s302 = sld [smem:[#allocation2 + $0x46]]
    %v303 = vstv %s302
    %v304 = vadd.f32 %v301, %v303
    %305 = vst [vmem:[%s2] sm:$0xff] %v304
    // Predicated region
    $region14: #{mlp_forward.1} parent=1 // pred_check
      _
    $region15: #{mlp_forward.1} parent=1 // pred_check_branch
      %307 = sbr.rel (0) target = $region17
    $region16: #{mlp_forward.1} parent=1 // pred_region
      _
    $region17: #{mlp_forward.1} parent=1 // pred_fallthru
      _
    // Predicated region
    $region18: #{mlp_forward.1} parent=1 // pred_check
      _
    $region19: #{mlp_forward.1} parent=1 // pred_check_branch
      %309 = sbr.rel (0) target = $region21
    $region20: #{mlp_forward.1} parent=1 // pred_region
      _
    $region21: #{mlp_forward.1} parent=1 // pred_fallthru
      _
    %310 = vsyncpa [#allocation3], 1

</llo_original>
